<compile_context>
chip_gen: v7x
topology: tpu7x:2x2x1
jax: 0.10.0
libtpu: 0.0.40
codegen_flags: <defaults>
</compile_context>

<pallas_src>
import functools
import math

import jax
import jax.numpy as jnp
from jax.experimental import pallas as pl
from jax.experimental.pallas import tpu as pltpu


def _timestep_embedder_kernel(t_ref, w1c_ref, w1s_ref, b1_ref, w2_ref, b2_ref, o_ref,
                              *, half, max_period):
    # t_ref: (TILE_N, 1) f32 column of timesteps.
    t = t_ref[...]

    # Frequencies computed in-kernel: exp(-log(max_period) * k / half), k = 0..half-1.
    k = jax.lax.broadcasted_iota(jnp.int32, (1, half), 1).astype(jnp.float32)
    freqs = jnp.exp((-math.log(max_period) / half) * k)          # (1, half), EUP
    args = t * freqs                                             # (TILE_N, half)

    cos_e = jnp.cos(args)
    sin_e = jnp.sin(args)

    # Linear 1, split over the cos/sin halves (no concat), f32 accumulation on the MXU.
    wdt = w1c_ref.dtype
    h = jnp.dot(cos_e.astype(wdt), w1c_ref[...], preferred_element_type=jnp.float32)
    h = h + jnp.dot(sin_e.astype(wdt), w1s_ref[...], preferred_element_type=jnp.float32)
    h = h + b1_ref[...]

    # SiLU: h * sigmoid(h) = h / (1 + exp(-h)); reciprocal routed to the EUP.
    h = h * pl.reciprocal(1.0 + jnp.exp(-h), approx=True)

    # Linear 2.
    out = jnp.dot(h.astype(w2_ref.dtype), w2_ref[...], preferred_element_type=jnp.float32)
    out = out + b2_ref[...]
    o_ref[...] = out.astype(o_ref.dtype)


def timestep_embedder(t, params, frequency_embedding_size=256, max_period=10000,
                      weight_dtype=jnp.bfloat16, out_dtype=jnp.float32, tile_n=256):
    """t: (N,) float timesteps -> (N, out_size) embeddings.

    params: dict with 'w1' (F, hidden), 'b1' (hidden,), 'w2' (hidden, out), 'b2' (out,);
            weights are stored (in, out), i.e. the transpose of torch.nn.Linear.weight.
    """
    w1, b1, w2, b2 = params["w1"], params["b1"], params["w2"], params["b2"]
    N = t.shape[0]
    F = frequency_embedding_size
    half = F // 2
    hidden = w1.shape[1]
    out_size = w2.shape[1]
    assert w1.shape[0] == F and w2.shape[0] == hidden

    # Split w1 into the cos / sin halves.  For odd F the PyTorch module appends a zero
    # column to the embedding, so w1 row 2*half contributes nothing and is dropped.
    w1c = w1[:half].astype(weight_dtype)
    w1s = w1[half:2 * half].astype(weight_dtype)
    w2c = w2.astype(weight_dtype)
    b1_2d = b1.astype(jnp.float32).reshape(1, hidden)
    b2_2d = b2.astype(jnp.float32).reshape(1, out_size)

    # (N, 1) column of timesteps.  (A (1, N) lane-dense layout would save a few masked
    # vlds at very large N but costs an in-kernel transpose; keep the simple column.)
    t2d = t.astype(jnp.float32).reshape(N, 1)

    # Batch tile: full batch if it fits one block, else tile_n (multiple of 8) rows per step.
    if N <= tile_n:
        tile = N
        nb = 1
    else:
        tile = tile_n
        nb = pl.cdiv(N, tile)

    kernel = functools.partial(_timestep_embedder_kernel, half=half, max_period=max_period)

    # Rough VMEM budget: resident weights (x2 buffers) + per-tile activations.  Only raise
    # the scoped-VMEM limit when the defaults (16 MiB on v5e) would not be enough.
    w_itemsize = jnp.dtype(weight_dtype).itemsize
    weight_bytes = (2 * half * hidden + hidden * out_size) * w_itemsize \
                   + (hidden + out_size) * 4
    act_bytes = tile * (2 * 4 + 2 * out_size * 4 + 2 * half * 4 + 2 * hidden * 4)
    vmem_needed = 2 * weight_bytes + act_bytes + (1 << 20)

    cp_kwargs = dict(dimension_semantics=("parallel",))
    if vmem_needed > 16 * 1024 * 1024:
        cp_kwargs["vmem_limit_bytes"] = int(min(vmem_needed, 64 * 1024 * 1024))

    return pl.pallas_call(
        kernel,
        out_shape=jax.ShapeDtypeStruct((N, out_size), out_dtype),
        grid_spec=pltpu.PrefetchScalarGridSpec(
            num_scalar_prefetch=0,
            grid=(nb,),
            in_specs=[
                pl.BlockSpec((tile, 1), lambda i: (i, 0)),            # t column (tiled)
                pl.BlockSpec((half, hidden), lambda i: (0, 0)),       # w1 (cos half), resident
                pl.BlockSpec((half, hidden), lambda i: (0, 0)),       # w1 (sin half), resident
                pl.BlockSpec((1, hidden), lambda i: (0, 0)),          # b1, resident
                pl.BlockSpec((hidden, out_size), lambda i: (0, 0)),   # w2, resident
                pl.BlockSpec((1, out_size), lambda i: (0, 0)),        # b2, resident
            ],
            out_specs=pl.BlockSpec((tile, out_size), lambda i: (i, 0)),
        ),
        compiler_params=pltpu.CompilerParams(**cp_kwargs),
    )(t2d, w1c, w1s, b1_2d, w2c, b2_2d)


def reference(t, params, frequency_embedding_size=256, max_period=10000):
    """Pure-JAX reference mirroring the PyTorch module (f32 weights)."""
    dim = frequency_embedding_size
    half = dim // 2
    freqs = jnp.exp(-math.log(max_period) * jnp.arange(half, dtype=jnp.float32) / half)
    args = t.astype(jnp.float32)[:, None] * freqs[None]
    emb = jnp.concatenate([jnp.cos(args), jnp.sin(args)], axis=-1)
    if dim % 2:
        emb = jnp.concatenate([emb, jnp.zeros_like(emb[:, :1])], axis=-1)
    h = emb @ params["w1"] + params["b1"]
    h = h * jax.nn.sigmoid(h)
    return h @ params["w2"] + params["b2"]


if __name__ == "__main__":
    key = jax.random.PRNGKey(0)
    k_t, k_w1, k_b1, k_w2, k_b2 = jax.random.split(key, 5)

    N = 20                     # batch of timesteps (exercises a partial last tile below)
    F = 256                    # frequency_embedding_size (module default)
    hidden = 128               # hidden_size
    out_size = 128             # out_size (defaults to hidden_size)

    # Deterministic synthetic parameters (weights stored as (in, out)).
    params = {
        "w1": jax.random.normal(k_w1, (F, hidden), jnp.float32) * 0.02,
        "b1": jax.random.normal(k_b1, (hidden,), jnp.float32) * 0.01,
        "w2": jax.random.normal(k_w2, (hidden, out_size), jnp.float32) * 0.02,
        "b2": jax.random.normal(k_b2, (out_size,), jnp.float32) * 0.01,
    }

    # Fractional timesteps in [0, 1000), one per batch element.
    t = jax.random.uniform(k_t, (N,), jnp.float32, minval=0.0, maxval=1000.0)

    ref = reference(t, params, frequency_embedding_size=F)

    # f32-weight path, tiled over N (tile_n=8 -> 3 grid steps, last one partial).
    out_f32 = timestep_embedder(t, params, frequency_embedding_size=F,
                                weight_dtype=jnp.float32, tile_n=8)
    out_f32 = jax.block_until_ready(out_f32)
    assert out_f32.shape == (N, out_size)
    assert jnp.allclose(out_f32, ref, atol=1e-3, rtol=1e-3), "f32 path mismatch vs reference"

    # bf16-weight path (halves weight HBM traffic), single block, explicit f32 output.
    out_bf16 = timestep_embedder(t, params, frequency_embedding_size=F,
                                 weight_dtype=jnp.bfloat16)
    out_bf16 = jax.block_until_ready(out_bf16)
    assert out_bf16.shape == (N, out_size)
    assert out_bf16.dtype == jnp.float32
    assert jnp.allclose(out_bf16, ref, atol=5e-2, rtol=5e-2), "bf16 path mismatch vs reference"

    print("KERNEL_OK")
</pallas_src>

<mosaic_0001>
module attributes {stable_mosaic.version = 11 : i64} {
  func.func @_timestep_embedder_kernel(%arg0: i32, %arg1: memref<8x1xf32, #tpu.memory_space<vmem>>, %arg2: memref<128x128xf32, #tpu.memory_space<vmem>>, %arg3: memref<128x128xf32, #tpu.memory_space<vmem>>, %arg4: memref<1x128xf32, #tpu.memory_space<vmem>>, %arg5: memref<128x128xf32, #tpu.memory_space<vmem>>, %arg6: memref<1x128xf32, #tpu.memory_space<vmem>>, %arg7: memref<8x128xf32, #tpu.memory_space<vmem>>) attributes {dimension_semantics = [#tpu.dimension_semantics<parallel>], iteration_bounds = array<i64: 3>, scalar_prefetch = 0 : i64, scratch_operands = 0 : i64, tpu.core_type = #tpu.core_type<tc>, window_params = [{transform_indices = @transform_0, window_bounds = array<i64: 8, 1>}, {pipeline_mode = #tpu.pipeline_mode<synchronous>, transform_indices = @transform_1, window_bounds = array<i64: 128, 128>}, {pipeline_mode = #tpu.pipeline_mode<synchronous>, transform_indices = @transform_2, window_bounds = array<i64: 128, 128>}, {pipeline_mode = #tpu.pipeline_mode<synchronous>, transform_indices = @transform_3, window_bounds = array<i64: 1, 128>}, {pipeline_mode = #tpu.pipeline_mode<synchronous>, transform_indices = @transform_4, window_bounds = array<i64: 128, 128>}, {pipeline_mode = #tpu.pipeline_mode<synchronous>, transform_indices = @transform_5, window_bounds = array<i64: 1, 128>}, {transform_indices = @transform_6, window_bounds = array<i64: 8, 128>}]} {
    %c0 = arith.constant 0 : index
    %c0_0 = arith.constant 0 : index
    %0 = vector.load %arg1[%c0, %c0_0] : memref<8x1xf32, #tpu.memory_space<vmem>>, vector<8x1xf32>
    %1 = tpu.iota {dimensions = array<i32: 1>} : vector<1x128xi32>
    %2 = arith.sitofp %1 : vector<1x128xi32> to vector<1x128xf32>
    %cst = arith.constant -0.0719557852 : f32
    %3 = vector.broadcast %cst : f32 to vector<1x128xf32>
    %4 = arith.mulf %3, %2 : vector<1x128xf32>
    %5 = math.exp %4 : vector<1x128xf32>
    %6 = vector.broadcast %0 : vector<8x1xf32> to vector<8x128xf32>
    %7 = vector.broadcast %5 : vector<1x128xf32> to vector<8x128xf32>
    %8 = arith.mulf %6, %7 : vector<8x128xf32>
    %9 = math.cos %8 : vector<8x128xf32>
    %10 = math.sin %8 : vector<8x128xf32>
    %c0_1 = arith.constant 0 : index
    %c0_2 = arith.constant 0 : index
    %11 = vector.load %arg2[%c0_1, %c0_2] : memref<128x128xf32, #tpu.memory_space<vmem>>, vector<128x128xf32>
    %cst_3 = arith.constant dense<0.000000e+00> : vector<8x128xf32>
    %12 = tpu.matmul %9, %11, %cst_3 {dimension_numbers = #tpu.dot_dimension_numbers<[1], [0], [0], [1], [0, 0, 1, 1], [], []>} : vector<8x128xf32>, vector<128x128xf32>, vector<8x128xf32> -> vector<8x128xf32>
    %c0_4 = arith.constant 0 : index
    %c0_5 = arith.constant 0 : index
    %13 = vector.load %arg3[%c0_4, %c0_5] : memref<128x128xf32, #tpu.memory_space<vmem>>, vector<128x128xf32>
    %cst_6 = arith.constant dense<0.000000e+00> : vector<8x128xf32>
    %14 = tpu.matmul %10, %13, %cst_6 {dimension_numbers = #tpu.dot_dimension_numbers<[1], [0], [0], [1], [0, 0, 1, 1], [], []>} : vector<8x128xf32>, vector<128x128xf32>, vector<8x128xf32> -> vector<8x128xf32>
    %15 = arith.addf %12, %14 : vector<8x128xf32>
    %c0_7 = arith.constant 0 : index
    %c0_8 = arith.constant 0 : index
    %16 = vector.load %arg4[%c0_7, %c0_8] : memref<1x128xf32, #tpu.memory_space<vmem>>, vector<1x128xf32>
    %17 = vector.broadcast %16 : vector<1x128xf32> to vector<8x128xf32>
    %18 = arith.addf %15, %17 : vector<8x128xf32>
    %cst_9 = arith.constant 0.000000e+00 : f32
    %19 = vector.broadcast %cst_9 : f32 to vector<8x128xf32>
    %20 = arith.subf %19, %18 : vector<8x128xf32>
    %21 = math.exp %20 : vector<8x128xf32>
    %cst_10 = arith.constant 1.000000e+00 : f32
    %22 = vector.broadcast %cst_10 : f32 to vector<8x128xf32>
    %23 = arith.addf %22, %21 : vector<8x128xf32>
    %24 = tpu.reciprocal %23 {approx = true} : vector<8x128xf32> -> vector<8x128xf32>
    %25 = arith.mulf %18, %24 : vector<8x128xf32>
    %c0_11 = arith.constant 0 : index
    %c0_12 = arith.constant 0 : index
    %26 = vector.load %arg5[%c0_11, %c0_12] : memref<128x128xf32, #tpu.memory_space<vmem>>, vector<128x128xf32>
    %cst_13 = arith.constant dense<0.000000e+00> : vector<8x128xf32>
    %27 = tpu.matmul %25, %26, %cst_13 {dimension_numbers = #tpu.dot_dimension_numbers<[1], [0], [0], [1], [0, 0, 1, 1], [], []>} : vector<8x128xf32>, vector<128x128xf32>, vector<8x128xf32> -> vector<8x128xf32>
    %c0_14 = arith.constant 0 : index
    %c0_15 = arith.constant 0 : index
    %28 = vector.load %arg6[%c0_14, %c0_15] : memref<1x128xf32, #tpu.memory_space<vmem>>, vector<1x128xf32>
    %29 = vector.broadcast %28 : vector<1x128xf32> to vector<8x128xf32>
    %30 = arith.addf %27, %29 : vector<8x128xf32>
    %c0_16 = arith.constant 0 : index
    %c0_17 = arith.constant 0 : index
    %31 = vector.load %arg7[%c0_16, %c0_17] : memref<8x128xf32, #tpu.memory_space<vmem>>, vector<8x128xf32>
    tpu.vector_store %arg7[%c0_16, %c0_17], %30 {strides = array<i32>} : memref<8x128xf32, #tpu.memory_space<vmem>>, vector<8x128xf32>,
    return
  }
  func.func @transform_0(%arg0: i32) -> (i32, i32) {
    %c0_i32 = arith.constant 0 : i32
    %c0_i32_0 = arith.constant 0 : i32
    return %arg0, %c0_i32 : i32, i32
  }
  func.func @transform_1(%arg0: i32) -> (i32, i32) {
    %c0_i32 = arith.constant 0 : i32
    %c0_i32_0 = arith.constant 0 : i32
    %c0_i32_1 = arith.constant 0 : i32
    return %c0_i32, %c0_i32_0 : i32, i32
  }
  func.func @transform_2(%arg0: i32) -> (i32, i32) {
    %c0_i32 = arith.constant 0 : i32
    %c0_i32_0 = arith.constant 0 : i32
    %c0_i32_1 = arith.constant 0 : i32
    return %c0_i32, %c0_i32_0 : i32, i32
  }
  func.func @transform_3(%arg0: i32) -> (i32, i32) {
    %c0_i32 = arith.constant 0 : i32
    %c0_i32_0 = arith.constant 0 : i32
    %c0_i32_1 = arith.constant 0 : i32
    return %c0_i32, %c0_i32_0 : i32, i32
  }
  func.func @transform_4(%arg0: i32) -> (i32, i32) {
    %c0_i32 = arith.constant 0 : i32
    %c0_i32_0 = arith.constant 0 : i32
    %c0_i32_1 = arith.constant 0 : i32
    return %c0_i32, %c0_i32_0 : i32, i32
  }
  func.func @transform_5(%arg0: i32) -> (i32, i32) {
    %c0_i32 = arith.constant 0 : i32
    %c0_i32_0 = arith.constant 0 : i32
    %c0_i32_1 = arith.constant 0 : i32
    return %c0_i32, %c0_i32_0 : i32, i32
  }
  func.func @transform_6(%arg0: i32) -> (i32, i32) {
    %c0_i32 = arith.constant 0 : i32
    %c0_i32_0 = arith.constant 0 : i32
    return %arg0, %c0_i32 : i32, i32
  }
}

</mosaic_0001>

<llo_original>
// kernel: tpu_custom_call.1
$region0: #{tpu_custom_call.1}
  #allocation0 [shape = 'u32[]', space=smem, size = 0x4, offset = 0x4, fixed_abs, tag = 'smem constant byte address 0x4 - core index']
  #allocation1 [shape = 'u32[144,128]{1,0:T(1,128)}', space=vmem, size = 0x12000, scoped, tag = 'internal scratch']
  %s0 = inlined_call_operand.vmem [shape: f32[20,1], index: 0, kind: input, shape index: {}]
  %s1 = inlined_call_operand.hbm [shape: f32[128,128], index: 1, kind: input, shape index: {}]
  %s2 = inlined_call_operand.hbm [shape: f32[128,128], index: 2, kind: input, shape index: {}]
  %s3 = inlined_call_operand.vmem [shape: f32[1,128], index: 3, kind: input, shape index: {}]
  %s4 = inlined_call_operand.hbm [shape: f32[128,128], index: 4, kind: input, shape index: {}]
  %s5 = inlined_call_operand.vmem [shape: f32[1,128], index: 5, kind: input, shape index: {}]
  %s6 = inlined_call_operand.hbm [shape: f32[20,128], index: 6, kind: output, shape index: {}]
  %s7 = sld [smem:[#allocation0]]
  $region69: #{tpu_custom_call.1} parent=0
    _
  %s9 = ssub.s32 1, %s7
  %s10 = scalar_select 0, %s9, %s7
  $region1: #{tpu_custom_call.1} parent=0
    #allocation2 [shape = 'u8[65536]{0}', space=vmem, size = 0x10000, scoped, tag = 'input window, operand 1, single buffered']
    #allocation3 [shape = 's32[2]{0}', space=sflag, size = 0x8, scoped, tag = 'scoped memory for tpu_custom_call.1']
    #allocation4 [shape = 's32[2]{0}', space=sflag, size = 0x8, scoped, tag = 'scoped memory for tpu_custom_call.1']
    #allocation5 [shape = 'u8[65536]{0}', space=vmem, size = 0x10000, scoped, tag = 'input window, operand 2, single buffered']
    #allocation6 [shape = 's32[1]{0}', space=sflag, size = 0x4, scoped, tag = 'scoped memory for tpu_custom_call.1']
    #allocation7 [shape = 'u8[65536]{0}', space=vmem, size = 0x10000, scoped, tag = 'input window, operand 4, single buffered']
    #allocation8 [shape = 'u8[8192]{0}', space=vmem, size = 0x2000, scoped, tag = 'output window, operand 0']
    %11 = vsyncpa [#allocation3], 0
    %12 = vsyncpa [#allocation6], 0
    %13 = vsyncpa [#allocation4], 0
    %s14 = scalar_lea.sflag [#allocation4], 1
    %15 = vsyncpa %s14, 0
    loop: start=0, step=1, limit=5
    $region2: #{tpu_custom_call.1} parent=1 // loop_pre_header
      _
    $region3: #{tpu_custom_call.1} parent=1 // loop_header
      %s17 = sphi 0, %s21
      %p18 = scmp.ge.s32.totalorder %s17, 5
      %s27 = sphi 0, %s29
      %s30 = sphi 0, %s27
      %s31 = sphi 0, %s30
      %s47 = sphi 0, %s31
      %s51 = sphi 0, %s51
      %s53 = sphi 0, %s51
      %s54 = sphi 0, %s53
      %s68 = sphi 0, %s54
      %s72 = sphi 0, %s72
      %s74 = sphi 0, %s72
      %s75 = sphi 0, %s74
      %s89 = sphi 0, %s75
      %s93 = sphi 0, %s93
      %s95 = sphi 0, %s93
      %s96 = sphi 0, %s95
      %s110 = sphi 0, %s96
      %s114 = sphi 0, %s114
      %s116 = sphi 0, %s114
      %s117 = sphi 0, %s116
      %s131 = sphi 0, %s117
      %s135 = sphi 0, %s135
      %s137 = sphi 0, %s135
      %s138 = sphi 0, %s137
      %s152 = sphi 0, %s138
      %s158 = sphi 0, %s160
      %s161 = sphi 0, %s158
      %s162 = sphi 0, %s161
      %s178 = sphi 0, %s162
    $region4: #{tpu_custom_call.1} parent=1 // loop_header_branch
      %20 = sbr.rel (%p18) target = $region8
    $region5: #{tpu_custom_call.1} parent=1 // loop_body
      %s22 = ssub.s32 %s17, 1
      %s23 = ssub.s32 %s17, 2
      %s24 = sadd.s32 %s17, 1
      %s25 = ssub.s32 %s17, %s24
      %p26 = scmp.eq.s32.totalorder %s25, 0
      %s28 = sadd.s32 %s27, 1
      %s29 = scalar_select %p26, %s27, %s28
      %p32 = pneg %p26
      %p33 = scmp.eq.s32.totalorder %s17, 2
      %p34 = por %p32, %p33
      %p35 = scmp.ne.s32.totalorder %s27, %s30
      %p36 = scmp.eq.s32.totalorder %s17, 0
      %p37 = por %p35, %p36
      %p38 = scmp.ne.s32.totalorder %s27, %s30
      %p39 = scmp.eq.s32.totalorder %s22, 2
      %p40 = por %p38, %p39
      %p41 = scmp.ne.s32.totalorder %s30, %s31
      %p42 = scmp.eq.s32.totalorder %s22, 0
      %p43 = por %p41, %p42
      %p44 = scmp.ne.s32.totalorder %s30, %s31
      %p45 = scmp.eq.s32.totalorder %s23, 2
      %p46 = por %p44, %p45
      %p48 = scmp.ne.s32.totalorder %s31, %s47
      %p49 = scmp.eq.s32.totalorder %s23, 0
      %p50 = por %p48, %p49
      %s52 = sadd.s32 %s51, 1
      %p55 = scmp.eq.s32.totalorder %s17, 2
      %p56 = scmp.ne.s32.totalorder %s51, %s53
      %p57 = scmp.eq.s32.totalorder %s17, 0
      %p58 = por %p56, %p57
      %p59 = scmp.ne.s32.totalorder %s51, %s53
      %p60 = scmp.eq.s32.totalorder %s22, 2
      %p61 = por %p59, %p60
      %p62 = scmp.ne.s32.totalorder %s53, %s54
      %p63 = scmp.eq.s32.totalorder %s22, 0
      %p64 = por %p62, %p63
      %p65 = scmp.ne.s32.totalorder %s53, %s54
      %p66 = scmp.eq.s32.totalorder %s23, 2
      %p67 = por %p65, %p66
      %p69 = scmp.ne.s32.totalorder %s54, %s68
      %p70 = scmp.eq.s32.totalorder %s23, 0
      %p71 = por %p69, %p70
      %s73 = sadd.s32 %s72, 1
      %p76 = scmp.eq.s32.totalorder %s17, 2
      %p77 = scmp.ne.s32.totalorder %s72, %s74
      %p78 = scmp.eq.s32.totalorder %s17, 0
      %p79 = por %p77, %p78
      %p80 = scmp.ne.s32.totalorder %s72, %s74
      %p81 = scmp.eq.s32.totalorder %s22, 2
      %p82 = por %p80, %p81
      %p83 = scmp.ne.s32.totalorder %s74, %s75
      %p84 = scmp.eq.s32.totalorder %s22, 0
      %p85 = por %p83, %p84
      %p86 = scmp.ne.s32.totalorder %s74, %s75
      %p87 = scmp.eq.s32.totalorder %s23, 2
      %p88 = por %p86, %p87
      %p90 = scmp.ne.s32.totalorder %s75, %s89
      %p91 = scmp.eq.s32.totalorder %s23, 0
      %p92 = por %p90, %p91
      %s94 = sadd.s32 %s93, 1
      %p97 = scmp.eq.s32.totalorder %s17, 2
      %p98 = scmp.ne.s32.totalorder %s93, %s95
      %p99 = scmp.eq.s32.totalorder %s17, 0
      %p100 = por %p98, %p99
      %p101 = scmp.ne.s32.totalorder %s93, %s95
      %p102 = scmp.eq.s32.totalorder %s22, 2
      %p103 = por %p101, %p102
      %p104 = scmp.ne.s32.totalorder %s95, %s96
      %p105 = scmp.eq.s32.totalorder %s22, 0
      %p106 = por %p104, %p105
      %p107 = scmp.ne.s32.totalorder %s95, %s96
      %p108 = scmp.eq.s32.totalorder %s23, 2
      %p109 = por %p107, %p108
      %p111 = scmp.ne.s32.totalorder %s96, %s110
      %p112 = scmp.eq.s32.totalorder %s23, 0
      %p113 = por %p111, %p112
      %s115 = sadd.s32 %s114, 1
      %p118 = scmp.eq.s32.totalorder %s17, 2
      %p119 = scmp.ne.s32.totalorder %s114, %s116
      %p120 = scmp.eq.s32.totalorder %s17, 0
      %p121 = por %p119, %p120
      %p122 = scmp.ne.s32.totalorder %s114, %s116
      %p123 = scmp.eq.s32.totalorder %s22, 2
      %p124 = por %p122, %p123
      %p125 = scmp.ne.s32.totalorder %s116, %s117
      %p126 = scmp.eq.s32.totalorder %s22, 0
      %p127 = por %p125, %p126
      %p128 = scmp.ne.s32.totalorder %s116, %s117
      %p129 = scmp.eq.s32.totalorder %s23, 2
      %p130 = por %p128, %p129
      %p132 = scmp.ne.s32.totalorder %s117, %s131
      %p133 = scmp.eq.s32.totalorder %s23, 0
      %p134 = por %p132, %p133
      %s136 = sadd.s32 %s135, 1
      %p139 = scmp.eq.s32.totalorder %s17, 2
      %p140 = scmp.ne.s32.totalorder %s135, %s137
      %p141 = scmp.eq.s32.totalorder %s17, 0
      %p142 = por %p140, %p141
      %p143 = scmp.ne.s32.totalorder %s135, %s137
      %p144 = scmp.eq.s32.totalorder %s22, 2
      %p145 = por %p143, %p144
      %p146 = scmp.ne.s32.totalorder %s137, %s138
      %p147 = scmp.eq.s32.totalorder %s22, 0
      %p148 = por %p146, %p147
      %p149 = scmp.ne.s32.totalorder %s137, %s138
      %p150 = scmp.eq.s32.totalorder %s23, 2
      %p151 = por %p149, %p150
      %p153 = scmp.ne.s32.totalorder %s138, %s152
      %p154 = scmp.eq.s32.totalorder %s23, 0
      %p155 = por %p153, %p154
      %s156 = ssub.s32 %s17, %s24
      %p157 = scmp.eq.s32.totalorder %s156, 0
      %s159 = sadd.s32 %s158, 1
      %s160 = scalar_select %p157, %s158, %s159
      %p163 = pneg %p157
      %p164 = scmp.eq.s32.totalorder %s17, 2
      %p165 = por %p163, %p164
      %p166 = scmp.ne.s32.totalorder %s158, %s161
      %p167 = scmp.eq.s32.totalorder %s17, 0
      %p168 = por %p166, %p167
      %p169 = scmp.ne.s32.totalorder %s158, %s161
      %p170 = scmp.eq.s32.totalorder %s22, 2
      %p171 = por %p169, %p170
      %p172 = scmp.ne.s32.totalorder %s161, %s162
      %p173 = scmp.eq.s32.totalorder %s22, 0
      %p174 = por %p172, %p173
      %p175 = scmp.ne.s32.totalorder %s161, %s162
      %p176 = scmp.eq.s32.totalorder %s23, 2
      %p177 = por %p175, %p176
      %p179 = scmp.ne.s32.totalorder %s162, %s178
      %p180 = scmp.eq.s32.totalorder %s23, 0
      %p181 = por %p179, %p180
      %p182 = scmp.le.s32.totalorder 1, %s17
      %p183 = scmp.lt.s32.totalorder %s17, 4
      %p184 = pnand %p182, %p183
      %p185 = pneg %p184
      // Predicated region
      $region9: #{tpu_custom_call.1} parent=5 // pred_check
        _
      $region10: #{tpu_custom_call.1} parent=5 // pred_check_branch
        %187 = sbr.rel (%p184) target = $region12
      $region11: #{tpu_custom_call.1} parent=5 // pred_region
        %s188 = ssub.s32 %s17, 1
        // Predicated region
        $region13: #{tpu_custom_call.1} parent=11 // pred_check
          %p189 = pneg %p64
        $region14: #{tpu_custom_call.1} parent=11 // pred_check_branch
          %191 = sbr.rel (%p189) target = $region16
        $region15: #{tpu_custom_call.1} parent=11 // pred_region
          %s193 = ssub.s32 2048, 2048
          %194 = vsyncadd [#allocation3], %s193
          %s195 = sshll.u32 [#allocation2], 4
          %s196 = int_to_ptr.vmem [resolvable:$true] %s195
          %201 = dma.hbm_to_vmem [thread:$0]  %s1, 2048, %s196, [#allocation3], 128, 128, 8
        $region16: #{tpu_custom_call.1} parent=11 // pred_fallthru
          _
        // Predicated region
        $region17: #{tpu_custom_call.1} parent=11 // pred_check
          %p202 = pneg %p85
        $region18: #{tpu_custom_call.1} parent=11 // pred_check_branch
          %204 = sbr.rel (%p202) target = $region20
        $region19: #{tpu_custom_call.1} parent=11 // pred_region
          %s206 = ssub.s32 2048, 2048
          %207 = vsyncadd [#allocation6], %s206
          %s208 = sshll.u32 [#allocation5], 4
          %s209 = int_to_ptr.vmem [resolvable:$true] %s208
          %214 = dma.hbm_to_vmem [thread:$0]  %s2, 2048, %s209, [#allocation6], 128, 128, 8
        $region20: #{tpu_custom_call.1} parent=11 // pred_fallthru
          _
        // Predicated region
        $region21: #{tpu_custom_call.1} parent=11 // pred_check
          %p215 = pneg %p106
        $region22: #{tpu_custom_call.1} parent=11 // pred_check_branch
          %217 = sbr.rel (%p215) target = $region24
        $region23: #{tpu_custom_call.1} parent=11 // pred_region
          _
        $region24: #{tpu_custom_call.1} parent=11 // pred_fallthru
          _
        // Predicated region
        $region25: #{tpu_custom_call.1} parent=11 // pred_check
          %p218 = pneg %p127
        $region26: #{tpu_custom_call.1} parent=11 // pred_check_branch
          %220 = sbr.rel (%p218) target = $region28
        $region27: #{tpu_custom_call.1} parent=11 // pred_region
          %s222 = ssub.s32 2048, 2048
          %223 = vsyncadd [#allocation6], %s222
          %s224 = sshll.u32 [#allocation7], 4
          %s225 = int_to_ptr.vmem [resolvable:$true] %s224
          %230 = dma.hbm_to_vmem [thread:$0]  %s4, 2048, %s225, [#allocation6], 128, 128, 8
        $region28: #{tpu_custom_call.1} parent=11 // pred_fallthru
          _
        // Predicated region
        $region29: #{tpu_custom_call.1} parent=11 // pred_check
          %p231 = pneg %p148
        $region30: #{tpu_custom_call.1} parent=11 // pred_check_branch
          %233 = sbr.rel (%p231) target = $region32
        $region31: #{tpu_custom_call.1} parent=11 // pred_region
          _
        $region32: #{tpu_custom_call.1} parent=11 // pred_fallthru
          _
      $region12: #{tpu_custom_call.1} parent=5 // pred_fallthru
        _
      %p234 = scmp.lt.s32.totalorder %s17, 3
      // Predicated region
      $region33: #{tpu_custom_call.1} parent=5 // pred_check
        %p235 = pneg %p234
      $region34: #{tpu_custom_call.1} parent=5 // pred_check_branch
        %237 = sbr.rel (%p235) target = $region36
      $region35: #{tpu_custom_call.1} parent=5 // pred_region
        // Predicated region
        $region37: #{tpu_custom_call.1} parent=35 // pred_check
          %p238 = pneg %p37
        $region38: #{tpu_custom_call.1} parent=35 // pred_check_branch
          %240 = sbr.rel (%p238) target = $region40
        $region39: #{tpu_custom_call.1} parent=35 // pred_region
          %p241 = scmp.lt.s32.totalorder %s17, 2
          %s242 = scalar_select %p241, %s17, 2
          %s243 = smul.addr %s242, 8
          %s244 = scalar_lea.vmem %s0, %s243
        $region40: #{tpu_custom_call.1} parent=35 // pred_fallthru
          _
      $region36: #{tpu_custom_call.1} parent=5 // pred_fallthru
        _
      %p245 = scmp.le.s32.totalorder 1, %s17
      %p246 = scmp.lt.s32.totalorder %s17, 4
      %p247 = pnand %p245, %p246
      %p248 = pneg %p247
      // Predicated region
      $region41: #{tpu_custom_call.1} parent=5 // pred_check
        _
      $region42: #{tpu_custom_call.1} parent=5 // pred_check_branch
        %250 = sbr.rel (%p247) target = $region44
      $region43: #{tpu_custom_call.1} parent=5 // pred_region
        %s251 = ssub.s32 %s17, 1
        // Predicated region
        $region45: #{tpu_custom_call.1} parent=43 // pred_check
          %p252 = pneg %p64
        $region46: #{tpu_custom_call.1} parent=43 // pred_check_branch
          %254 = sbr.rel (%p252) target = $region48
        $region47: #{tpu_custom_call.1} parent=43 // pred_region
          %255 = dma.done [#allocation3], 2048
        $region48: #{tpu_custom_call.1} parent=43 // pred_fallthru
          _
        // Predicated region
        $region49: #{tpu_custom_call.1} parent=43 // pred_check
          %p256 = pneg %p85
        $region50: #{tpu_custom_call.1} parent=43 // pred_check_branch
          %258 = sbr.rel (%p256) target = $region52
        $region51: #{tpu_custom_call.1} parent=43 // pred_region
          %259 = dma.done [#allocation6], 2048
        $region52: #{tpu_custom_call.1} parent=43 // pred_fallthru
          _
        // Predicated region
        $region53: #{tpu_custom_call.1} parent=43 // pred_check
          %p260 = pneg %p127
        $region54: #{tpu_custom_call.1} parent=43 // pred_check_branch
          %262 = sbr.rel (%p260) target = $region56
        $region55: #{tpu_custom_call.1} parent=43 // pred_region
          %263 = dma.done [#allocation6], 2048
        $region56: #{tpu_custom_call.1} parent=43 // pred_fallthru
          _
        %p264 = scmp.lt.s32.totalorder %s22, 2
        %s265 = scalar_select %p264, %s22, 2
        %s266 = smul.addr %s265, 8
        %s267 = scalar_lea.vmem %s0, %s266
        %p268 = pneg %p43
        %p269 = pneg %p40
        %p270 = pneg %p64
        %p271 = pneg %p61
        %p272 = pneg %p85
        %p273 = pneg %p82
        %p274 = pneg %p106
        %p275 = pneg %p103
        %p276 = pneg %p127
        %p277 = pneg %p124
        %p278 = pneg %p148
        %p279 = pneg %p145
        %p280 = pneg %p174
        %p281 = pneg %p171
        %s282 = sand.u32 %s161, 1
        %s283 = scalar_lea.sflag [#allocation4], %s282
        %s284 = sand.u32 %s161, 1
        %s285 = smul.addr %s284, 8
        %s286 = scalar_lea.vmem [#allocation8], %s285
        %p287 = scmp.lt.s32.totalorder %s22, 2
        %s288 = scalar_select %p287, %s22, 2
        %s289 = smul.addr %s288, 8
        %s290 = scalar_lea.vmem %s0, %s289
        %v291 = vld [vmem:[%s290] sm:$0xff]
        %v292 = vlaneseq
        %v293 = vand.u32 %v292, 127
        %v294 = vcvt.s32.f32 %v293
        %v295 = vmul.f32 %v294, -0.071955785
        %v296 = vmul.f32 %v295, 1.442695
        %v297 = vpow.pop %v296
        %299 = vset.pattern.permute.xlu0 0
        %300 = vperm.xlu0 %299, %v291
        %v301 = vpop.permute.xlu0 %300
        %v303 = vmul.f32 %v301, %v297
        %v304 = vand.u32 2147483647, %v303
        %vm305 = vcmp.le.f32.partialorder %v304, 0.7853982
        %vm306 = vcmp.lt.s32.totalorder %v303, 0
        %v307 = vand.u32 %v303, 2139095040
        %v308 = vshrl.u32 %v307, 23
        %v309 = vsub.s32 %v308, 127
        %v310 = vand.u32 2147483647, %v303
        %v311 = vand.u32 %v310, 8388607
        %v312 = vor.u32 %v311, 8388608
        %v313 = vsub.s32 0, %v312
        %v314 = vadd.s32 %v309, 1
        %vm315 = vcmp.gt.s32.totalorder %v314, 0
        %v316 = vsel %vm315, %v314, 0
        %v317 = vshrl.u32 %v316, 5
        %v318 = vand.u32 %v316, 31
        %v319 = vsub.s32 32, %v318
        %v320 = vshrl.u32 683565275, %v319
        %v321 = vshll.u32 683565275, %v318
        %v322 = vshrl.u32 2475754826, %v319
        %v323 = vor.u32 %v321, %v322
        %v324 = vshll.u32 2475754826, %v318
        %v325 = vshrl.u32 2131351028, %v319
        %v326 = vor.u32 %v324, %v325
        %v327 = vshll.u32 2131351028, %v318
        %v328 = vshrl.u32 2102212464, %v319
        %v329 = vor.u32 %v327, %v328
        %v330 = vshll.u32 2102212464, %v318
        %v331 = vshrl.u32 920167782, %v319
        %v332 = vor.u32 %v330, %v331
        %v333 = vshll.u32 920167782, %v318
        %v334 = vshrl.u32 1326507024, %v319
        %v335 = vor.u32 %v333, %v334
        %vm336 = vcmp.lt.s32.totalorder %v317, 1
        %vm337 = vcmp.lt.s32.totalorder %v317, 2
        %vm338 = vcmp.lt.s32.totalorder %v317, 3
        %vm339 = vcmp.lt.s32.totalorder %v317, 4
        %v340 = vsel %vm336, %v320, %v323
        %v341 = vsel %vm339, %v329, 2102212464
        %v342 = vsel %vm338, %v326, %v341
        %v343 = vsel %vm337, %v340, %v342
        %v344 = vsel %vm336, %v323, %v326
        %v345 = vsel %vm339, %v332, 920167782
        %v346 = vsel %vm338, %v329, %v345
        %v347 = vsel %vm337, %v344, %v346
        %v348 = vsel %vm336, %v326, %v329
        %v349 = vsel %vm339, %v335, 1326507024
        %v350 = vsel %vm338, %v332, %v349
        %v351 = vsel %vm337, %v348, %v350
        %v352 = vshll.u32 %v312, 8
        %v353 = vmul.u32.u64.compose %v352, %v351
        %v354 = vextract.low.u32 %v353
        %v355 = vextract.high.u32 %v353
        %v356 = vmul.u32.u64.compose %v352, %v347
        %v357 = vextract.low.u32 %v356
        %v358 = vextract.high.u32 %v356
        %v359 = vmul.u32 %v352, %v343
        %v360 = vadd.s32 %v355, %v357
        %vm361 = vc.u32 %v355, %v357
        %v362 = vadd.s32 %v358, 1
        %v363 = vsel %vm361, %v362, %v358
        %v364 = vadd.s32 %v359, %v363
        %v365 = vadd.s32 %v364, 536870912
        %v366 = vshrl.u32 %v365, 30
        %v367 = vshll.u32 %v366, 30
        %v368 = vsub.s32 %v364, %v367
        %vm369 = vcmp.lt.s32.totalorder %v368, 0
        %v370 = vsub.s32 0, %v368
        %v371 = vsel %vm369, %v370, %v368
        %v372 = vclz %v371
        %v373 = vsub.s32 %v372, 2
        %vm374 = vcmp.gt.s32.totalorder 0, %v373
        %v375 = vsel %vm374, 0, %v373
        %v376 = vsub.s32 32, %v375
        %v377 = vshll.u32 %v368, %v375
        %v378 = vshrl.u32 %v360, %v376
        %v379 = vor.u32 %v377, %v378
        %v380 = vsub.s32 4294967266, %v375
        %v381 = vadd.s32 %v380, 127
        %v382 = vshll.u32 %v381, 23
        %v383 = vor.u32 4788187, %v382
        %v384 = vand.u32 2147483647, %v383
        %v386 = vcvt.s32.f32 %v379
        %v387 = vmul.f32 %v386, %v384
        %v388 = vxor.u32 %v387, 2147483648
        %v389 = vsel %vm306, %v388, %v387
        %v390 = vsub.s32 4, %v366
        %v391 = vsel %vm306, %v390, %v366
        %v392 = vsel %vm305, %v303, %v389
        %v393 = vsel %vm305, 0, %v391
        %v394 = vcosq.f32.pop %v392
        %v395 = vsinq.f32.pop %v392
        %vm396 = vweird.f32 %v303
        %v397 = vand.u32 %v393, 3
        %vm398 = vcmp.lt.s32.totalorder %v397, 2
        %vm399 = vcmp.eq.s32.totalorder %v397, 0
        %v400 = vxor.u32 %v395, 2147483648
        %v401 = vsel %vm399, %v394, %v400
        %vm402 = vcmp.eq.s32.totalorder %v397, 2
        %v403 = vxor.u32 %v394, 2147483648
        %v404 = vsel %vm402, %v403, %v395
        %v405 = vsel %vm398, %v401, %v404
        %v406 = vsel %vm396, nan, %v405
        %v407 = vand.u32 2147483647, %v303
        %vm408 = vcmp.le.f32.partialorder %v407, 0.7853982
        %vm409 = vcmp.lt.s32.totalorder %v303, 0
        %v410 = vand.u32 %v303, 2139095040
        %v411 = vshrl.u32 %v410, 23
        %v412 = vsub.s32 %v411, 127
        %v413 = vand.u32 2147483647, %v303
        %v414 = vand.u32 %v413, 8388607
        %v415 = vor.u32 %v414, 8388608
        %v416 = vsub.s32 0, %v415
        %v417 = vadd.s32 %v412, 1
        %vm418 = vcmp.gt.s32.totalorder %v417, 0
        %v419 = vsel %vm418, %v417, 0
        %v420 = vshrl.u32 %v419, 5
        %v421 = vand.u32 %v419, 31
        %v422 = vsub.s32 32, %v421
        %v423 = vshrl.u32 683565275, %v422
        %v424 = vshll.u32 683565275, %v421
        %v425 = vshrl.u32 2475754826, %v422
        %v426 = vor.u32 %v424, %v425
        %v427 = vshll.u32 2475754826, %v421
        %v428 = vshrl.u32 2131351028, %v422
        %v429 = vor.u32 %v427, %v428
        %v430 = vshll.u32 2131351028, %v421
        %v431 = vshrl.u32 2102212464, %v422
        %v432 = vor.u32 %v430, %v431
        %v433 = vshll.u32 2102212464, %v421
        %v434 = vshrl.u32 920167782, %v422
        %v435 = vor.u32 %v433, %v434
        %v436 = vshll.u32 920167782, %v421
        %v437 = vshrl.u32 1326507024, %v422
        %v438 = vor.u32 %v436, %v437
        %vm439 = vcmp.lt.s32.totalorder %v420, 1
        %vm440 = vcmp.lt.s32.totalorder %v420, 2
        %vm441 = vcmp.lt.s32.totalorder %v420, 3
        %vm442 = vcmp.lt.s32.totalorder %v420, 4
        %v443 = vsel %vm439, %v423, %v426
        %v444 = vsel %vm442, %v432, 2102212464
        %v445 = vsel %vm441, %v429, %v444
        %v446 = vsel %vm440, %v443, %v445
        %v447 = vsel %vm439, %v426, %v429
        %v448 = vsel %vm442, %v435, 920167782
        %v449 = vsel %vm441, %v432, %v448
        %v450 = vsel %vm440, %v447, %v449
        %v451 = vsel %vm439, %v429, %v432
        %v452 = vsel %vm442, %v438, 1326507024
        %v453 = vsel %vm441, %v435, %v452
        %v454 = vsel %vm440, %v451, %v453
        %v455 = vshll.u32 %v415, 8
        %v456 = vmul.u32.u64.compose %v455, %v454
        %v457 = vextract.low.u32 %v456
        %v458 = vextract.high.u32 %v456
        %v459 = vmul.u32.u64.compose %v455, %v450
        %v460 = vextract.low.u32 %v459
        %v461 = vextract.high.u32 %v459
        %v462 = vmul.u32 %v455, %v446
        %v463 = vadd.s32 %v458, %v460
        %vm464 = vc.u32 %v458, %v460
        %v465 = vadd.s32 %v461, 1
        %v466 = vsel %vm464, %v465, %v461
        %v467 = vadd.s32 %v462, %v466
        %v468 = vadd.s32 %v467, 536870912
        %v469 = vshrl.u32 %v468, 30
        %v470 = vshll.u32 %v469, 30
        %v471 = vsub.s32 %v467, %v470
        %vm472 = vcmp.lt.s32.totalorder %v471, 0
        %v473 = vsub.s32 0, %v471
        %v474 = vsel %vm472, %v473, %v471
        %v475 = vclz %v474
        %v476 = vsub.s32 %v475, 2
        %vm477 = vcmp.gt.s32.totalorder 0, %v476
        %v478 = vsel %vm477, 0, %v476
        %v479 = vsub.s32 32, %v478
        %v480 = vshll.u32 %v471, %v478
        %v481 = vshrl.u32 %v463, %v479
        %v482 = vor.u32 %v480, %v481
        %v483 = vsub.s32 4294967266, %v478
        %v484 = vadd.s32 %v483, 127
        %v485 = vshll.u32 %v484, 23
        %v486 = vor.u32 4788187, %v485
        %v487 = vand.u32 2147483647, %v486
        %v489 = vcvt.s32.f32 %v482
        %v490 = vmul.f32 %v489, %v487
        %v491 = vxor.u32 %v490, 2147483648
        %v492 = vsel %vm409, %v491, %v490
        %v493 = vsub.s32 4, %v469
        %v494 = vsel %vm409, %v493, %v469
        %v495 = vsel %vm408, %v303, %v492
        %v496 = vsel %vm408, 0, %v494
        %v497 = vcosq.f32.pop %v495
        %v498 = vsinq.f32.pop %v495
        %vm499 = vweird.f32 %v303
        %v500 = vadd.s32 %v496, 3
        %v501 = vand.u32 %v500, 3
        %vm502 = vcmp.lt.s32.totalorder %v501, 2
        %vm503 = vcmp.eq.s32.totalorder %v501, 0
        %v504 = vxor.u32 %v498, 2147483648
        %v505 = vsel %vm503, %v497, %v504
        %vm506 = vcmp.eq.s32.totalorder %v501, 2
        %v507 = vxor.u32 %v497, 2147483648
        %v508 = vsel %vm506, %v507, %v498
        %v509 = vsel %vm502, %v505, %v508
        %v510 = vsel %vm499, nan, %v509
        %v511 = vld [vmem:[#allocation2] sm:$0xff]
        %v512 = vld [vmem:[#allocation2 + $0x8] sm:$0xff]
        %v513 = vld [vmem:[#allocation2 + $0x10] sm:$0xff]
        %v514 = vld [vmem:[#allocation2 + $0x18] sm:$0xff]
        %v515 = vld [vmem:[#allocation2 + $0x20] sm:$0xff]
        %v516 = vld [vmem:[#allocation2 + $0x28] sm:$0xff]
        %v517 = vld [vmem:[#allocation2 + $0x30] sm:$0xff]
        %v518 = vld [vmem:[#allocation2 + $0x38] sm:$0xff]
        %v519 = vld [vmem:[#allocation2 + $0x40] sm:$0xff]
        %v520 = vld [vmem:[#allocation2 + $0x48] sm:$0xff]
        %v521 = vld [vmem:[#allocation2 + $0x50] sm:$0xff]
        %v522 = vld [vmem:[#allocation2 + $0x58] sm:$0xff]
        %v523 = vld [vmem:[#allocation2 + $0x60] sm:$0xff]
        %v524 = vld [vmem:[#allocation2 + $0x68] sm:$0xff]
        %v525 = vld [vmem:[#allocation2 + $0x70] sm:$0xff]
        %v526 = vld [vmem:[#allocation2 + $0x78] sm:$0xff]
        %v527 = vld [vmem:[#allocation5] sm:$0xff]
        %v528 = vld [vmem:[#allocation5 + $0x8] sm:$0xff]
        %v529 = vld [vmem:[#allocation5 + $0x10] sm:$0xff]
        %v530 = vld [vmem:[#allocation5 + $0x18] sm:$0xff]
        %v531 = vld [vmem:[#allocation5 + $0x20] sm:$0xff]
        %v532 = vld [vmem:[#allocation5 + $0x28] sm:$0xff]
        %v533 = vld [vmem:[#allocation5 + $0x30] sm:$0xff]
        %v534 = vld [vmem:[#allocation5 + $0x38] sm:$0xff]
        %v535 = vld [vmem:[#allocation5 + $0x40] sm:$0xff]
        %v536 = vld [vmem:[#allocation5 + $0x48] sm:$0xff]
        %v537 = vld [vmem:[#allocation5 + $0x50] sm:$0xff]
        %v538 = vld [vmem:[#allocation5 + $0x58] sm:$0xff]
        %v539 = vld [vmem:[#allocation5 + $0x60] sm:$0xff]
        %v540 = vld [vmem:[#allocation5 + $0x68] sm:$0xff]
        %v541 = vld [vmem:[#allocation5 + $0x70] sm:$0xff]
        %v542 = vld [vmem:[#allocation5 + $0x78] sm:$0xff]
        %543 = vmatprep.subr.mxu0 0.0
        %544 = vmatpush1.msra.mxu0 %v527
        %545 = vmatprep.subr.mxu0 0.0
        %546 = vmatpush1.msra.mxu0 %v528
        %547 = vmatprep.subr.mxu0 0.0
        %548 = vmatpush1.msra.mxu0 %v529
        %549 = vmatprep.subr.mxu0 0.0
        %550 = vmatpush1.msra.mxu0 %v530
        %551 = vmatprep.subr.mxu0 0.0
        %552 = vmatpush1.msra.mxu0 %v531
        %553 = vmatprep.subr.mxu0 0.0
        %554 = vmatpush1.msra.mxu0 %v532
        %555 = vmatprep.subr.mxu0 0.0
        %556 = vmatpush1.msra.mxu0 %v533
        %557 = vmatprep.subr.mxu0 0.0
        %558 = vmatpush1.msra.mxu0 %v534
        %559 = vmatprep.subr.mxu0 0.0
        %560 = vmatpush1.msra.mxu0 %v535
        %561 = vmatprep.subr.mxu0 0.0
        %562 = vmatpush1.msra.mxu0 %v536
        %563 = vmatprep.subr.mxu0 0.0
        %564 = vmatpush1.msra.mxu0 %v537
        %565 = vmatprep.subr.mxu0 0.0
        %566 = vmatpush1.msra.mxu0 %v538
        %567 = vmatprep.subr.mxu0 0.0
        %568 = vmatpush1.msra.mxu0 %v539
        %569 = vmatprep.subr.mxu0 0.0
        %570 = vmatpush1.msra.mxu0 %v540
        %571 = vmatprep.subr.mxu0 0.0
        %572 = vmatpush1.msra.mxu0 %v541
        %573 = vmatprep.subr.mxu0 0.0
        %574 = vmatpush1.msra.mxu0 %v542
        %575 = vmatprep.subr.mxu0 0.0
        %576 = vmatpush1.msra.mxu0 0.0
        %577 = vmatprep.subr.mxu0 0.0
        %578 = vmatpush1.msra.mxu0 0.0
        %579 = vmatprep.subr.mxu0 0.0
        %580 = vmatpush1.msra.mxu0 0.0
        %581 = vmatprep.subr.mxu0 0.0
        %582 = vmatpush1.msra.mxu0 0.0
        %583 = vmatprep.subr.mxu0 0.0
        %584 = vmatpush1.msra.mxu0 0.0
        %585 = vmatprep.subr.mxu0 0.0
        %586 = vmatpush1.msra.mxu0 0.0
        %587 = vmatprep.subr.mxu0 0.0
        %588 = vmatpush1.msra.mxu0 0.0
        %589 = vmatprep.subr.mxu0 0.0
        %590 = vmatpush1.msra.mxu0 0.0
        %591 = vmatprep.subr.mxu0 0.0
        %592 = vmatpush1.msra.mxu0 0.0
        %593 = vmatprep.subr.mxu0 0.0
        %594 = vmatpush1.msra.mxu0 0.0
        %595 = vmatprep.subr.mxu0 0.0
        %596 = vmatpush1.msra.mxu0 0.0
        %597 = vmatprep.subr.mxu0 0.0
        %598 = vmatpush1.msra.mxu0 0.0
        %599 = vmatprep.subr.mxu0 0.0
        %600 = vmatpush1.msra.mxu0 0.0
        %601 = vmatprep.subr.mxu0 0.0
        %602 = vmatpush1.msra.mxu0 0.0
        %603 = vmatprep.subr.mxu0 0.0
        %604 = vmatpush1.msra.mxu0 0.0
        %605 = vmatprep.subr.mxu0 0.0
        %606 = vmatpush1.msra.mxu0 0.0
        %607 = vmatprep.mubr.f32.mxu0 0.0
        %608 = vmatmul.mubr.f32.gmra.mrb[0].mxu0 %v510
        %v609 = vpop.f32.mrb[0].mxu0
        %v610 = vadd.f32 0.0, %v609
        %v611 = vpop.f32.mrb[0].mxu0
        %612 = vdwg.mxu0
        %613 = vmatprep.subr.mxu0 0.0
        %614 = vmatpush1.msra.mxu0 %v511
        %615 = vmatprep.subr.mxu0 0.0
        %616 = vmatpush1.msra.mxu0 %v512
        %617 = vmatprep.subr.mxu0 0.0
        %618 = vmatpush1.msra.mxu0 %v513
        %619 = vmatprep.subr.mxu0 0.0
        %620 = vmatpush1.msra.mxu0 %v514
        %621 = vmatprep.subr.mxu0 0.0
        %622 = vmatpush1.msra.mxu0 %v515
        %623 = vmatprep.subr.mxu0 0.0
        %624 = vmatpush1.msra.mxu0 %v516
        %625 = vmatprep.subr.mxu0 0.0
        %626 = vmatpush1.msra.mxu0 %v517
        %627 = vmatprep.subr.mxu0 0.0
        %628 = vmatpush1.msra.mxu0 %v518
        %629 = vmatprep.subr.mxu0 0.0
        %630 = vmatpush1.msra.mxu0 %v519
        %631 = vmatprep.subr.mxu0 0.0
        %632 = vmatpush1.msra.mxu0 %v520
        %633 = vmatprep.subr.mxu0 0.0
        %634 = vmatpush1.msra.mxu0 %v521
        %635 = vmatprep.subr.mxu0 0.0
        %636 = vmatpush1.msra.mxu0 %v522
        %637 = vmatprep.subr.mxu0 0.0
        %638 = vmatpush1.msra.mxu0 %v523
        %639 = vmatprep.subr.mxu0 0.0
        %640 = vmatpush1.msra.mxu0 %v524
        %641 = vmatprep.subr.mxu0 0.0
        %642 = vmatpush1.msra.mxu0 %v525
        %643 = vmatprep.subr.mxu0 0.0
        %644 = vmatpush1.msra.mxu0 %v526
        %645 = vmatprep.subr.mxu0 0.0
        %646 = vmatpush1.msra.mxu0 0.0
        %647 = vmatprep.subr.mxu0 0.0
        %648 = vmatpush1.msra.mxu0 0.0
        %649 = vmatprep.subr.mxu0 0.0
        %650 = vmatpush1.msra.mxu0 0.0
        %651 = vmatprep.subr.mxu0 0.0
        %652 = vmatpush1.msra.mxu0 0.0
        %653 = vmatprep.subr.mxu0 0.0
        %654 = vmatpush1.msra.mxu0 0.0
        %655 = vmatprep.subr.mxu0 0.0
        %656 = vmatpush1.msra.mxu0 0.0
        %657 = vmatprep.subr.mxu0 0.0
        %658 = vmatpush1.msra.mxu0 0.0
        %659 = vmatprep.subr.mxu0 0.0
        %660 = vmatpush1.msra.mxu0 0.0
        %661 = vmatprep.subr.mxu0 0.0
        %662 = vmatpush1.msra.mxu0 0.0
        %663 = vmatprep.subr.mxu0 0.0
        %664 = vmatpush1.msra.mxu0 0.0
        %665 = vmatprep.subr.mxu0 0.0
        %666 = vmatpush1.msra.mxu0 0.0
        %667 = vmatprep.subr.mxu0 0.0
        %668 = vmatpush1.msra.mxu0 0.0
        %669 = vmatprep.subr.mxu0 0.0
        %670 = vmatpush1.msra.mxu0 0.0
        %671 = vmatprep.subr.mxu0 0.0
        %672 = vmatpush1.msra.mxu0 0.0
        %673 = vmatprep.subr.mxu0 0.0
        %674 = vmatpush1.msra.mxu0 0.0
        %675 = vmatprep.subr.mxu0 0.0
        %676 = vmatpush1.msra.mxu0 0.0
        %677 = vmatprep.mubr.f32.mxu0 0.0
        %678 = vmatmul.mubr.f32.gmra.mrb[0].mxu0 %v406
        %v679 = vpop.f32.mrb[0].mxu0
        %v680 = vadd.f32 %v610, %v679
        %v681 = vpop.f32.mrb[0].mxu0
        %682 = vdwg.mxu0
        %v683 = vld [vmem:[%s3] sm:$0x1]
        %v685 = vlaneseq
        %v686 = vshrl.u32 %v685, 7
        %v687 = vsub.s32 0, %v686
        %v688 = vrot.slane %v683, %v687
        %v690 = vadd.f32 %v680, %v688
        %v691 = vsub.f32 0.0, %v690
        %v692 = vmul.f32 %v691, 1.442695
        %v693 = vpow.pop %v692
        %v694 = vadd.f32 %v693, 1.0
        %v695 = vrcp.pop %v694
        %v696 = vmul.f32 %v690, %v695
        %v697 = vld [vmem:[#allocation7] sm:$0xff]
        %v698 = vld [vmem:[#allocation7 + $0x8] sm:$0xff]
        %v699 = vld [vmem:[#allocation7 + $0x10] sm:$0xff]
        %v700 = vld [vmem:[#allocation7 + $0x18] sm:$0xff]
        %v701 = vld [vmem:[#allocation7 + $0x20] sm:$0xff]
        %v702 = vld [vmem:[#allocation7 + $0x28] sm:$0xff]
        %v703 = vld [vmem:[#allocation7 + $0x30] sm:$0xff]
        %v704 = vld [vmem:[#allocation7 + $0x38] sm:$0xff]
        %v705 = vld [vmem:[#allocation7 + $0x40] sm:$0xff]
        %v706 = vld [vmem:[#allocation7 + $0x48] sm:$0xff]
        %v707 = vld [vmem:[#allocation7 + $0x50] sm:$0xff]
        %v708 = vld [vmem:[#allocation7 + $0x58] sm:$0xff]
        %v709 = vld [vmem:[#allocation7 + $0x60] sm:$0xff]
        %v710 = vld [vmem:[#allocation7 + $0x68] sm:$0xff]
        %v711 = vld [vmem:[#allocation7 + $0x70] sm:$0xff]
        %v712 = vld [vmem:[#allocation7 + $0x78] sm:$0xff]
        %v713 = vld [vmem:[%s5] sm:$0x1]
        %v715 = vlaneseq
        %v716 = vshrl.u32 %v715, 7
        %v717 = vsub.s32 0, %v716
        %v718 = vrot.slane %v713, %v717
        %720 = vmatprep.subr.mxu0 0.0
        %721 = vmatpush1.msra.mxu0 %v697
        %722 = vmatprep.subr.mxu0 0.0
        %723 = vmatpush1.msra.mxu0 %v698
        %724 = vmatprep.subr.mxu0 0.0
        %725 = vmatpush1.msra.mxu0 %v699
        %726 = vmatprep.subr.mxu0 0.0
        %727 = vmatpush1.msra.mxu0 %v700
        %728 = vmatprep.subr.mxu0 0.0
        %729 = vmatpush1.msra.mxu0 %v701
        %730 = vmatprep.subr.mxu0 0.0
        %731 = vmatpush1.msra.mxu0 %v702
        %732 = vmatprep.subr.mxu0 0.0
        %733 = vmatpush1.msra.mxu0 %v703
        %734 = vmatprep.subr.mxu0 0.0
        %735 = vmatpush1.msra.mxu0 %v704
        %736 = vmatprep.subr.mxu0 0.0
        %737 = vmatpush1.msra.mxu0 %v705
        %738 = vmatprep.subr.mxu0 0.0
        %739 = vmatpush1.msra.mxu0 %v706
        %740 = vmatprep.subr.mxu0 0.0
        %741 = vmatpush1.msra.mxu0 %v707
        %742 = vmatprep.subr.mxu0 0.0
        %743 = vmatpush1.msra.mxu0 %v708
        %744 = vmatprep.subr.mxu0 0.0
        %745 = vmatpush1.msra.mxu0 %v709
        %746 = vmatprep.subr.mxu0 0.0
        %747 = vmatpush1.msra.mxu0 %v710
        %748 = vmatprep.subr.mxu0 0.0
        %749 = vmatpush1.msra.mxu0 %v711
        %750 = vmatprep.subr.mxu0 0.0
        %751 = vmatpush1.msra.mxu0 %v712
        %752 = vmatprep.subr.mxu0 0.0
        %753 = vmatpush1.msra.mxu0 0.0
        %754 = vmatprep.subr.mxu0 0.0
        %755 = vmatpush1.msra.mxu0 0.0
        %756 = vmatprep.subr.mxu0 0.0
        %757 = vmatpush1.msra.mxu0 0.0
        %758 = vmatprep.subr.mxu0 0.0
        %759 = vmatpush1.msra.mxu0 0.0
        %760 = vmatprep.subr.mxu0 0.0
        %761 = vmatpush1.msra.mxu0 0.0
        %762 = vmatprep.subr.mxu0 0.0
        %763 = vmatpush1.msra.mxu0 0.0
        %764 = vmatprep.subr.mxu0 0.0
        %765 = vmatpush1.msra.mxu0 0.0
        %766 = vmatprep.subr.mxu0 0.0
        %767 = vmatpush1.msra.mxu0 0.0
        %768 = vmatprep.subr.mxu0 0.0
        %769 = vmatpush1.msra.mxu0 0.0
        %770 = vmatprep.subr.mxu0 0.0
        %771 = vmatpush1.msra.mxu0 0.0
        %772 = vmatprep.subr.mxu0 0.0
        %773 = vmatpush1.msra.mxu0 0.0
        %774 = vmatprep.subr.mxu0 0.0
        %775 = vmatpush1.msra.mxu0 0.0
        %776 = vmatprep.subr.mxu0 0.0
        %777 = vmatpush1.msra.mxu0 0.0
        %778 = vmatprep.subr.mxu0 0.0
        %779 = vmatpush1.msra.mxu0 0.0
        %780 = vmatprep.subr.mxu0 0.0
        %781 = vmatpush1.msra.mxu0 0.0
        %782 = vmatprep.subr.mxu0 0.0
        %783 = vmatpush1.msra.mxu0 0.0
        %784 = vmatprep.mubr.f32.mxu0 0.0
        %785 = vmatmul.mubr.f32.gmra.mrb[0].mxu0 %v696
        %v786 = vpop.f32.mrb[0].mxu0
        %v787 = vadd.f32 %v718, %v786
        %v788 = vpop.f32.mrb[0].mxu0
        %789 = vdwg.mxu0
        %790 = vst [vmem:[%s286] sm:$0xff] %v787
        %s791 = sand.u32 %s161, 1
        %s792 = scalar_lea.sflag [#allocation4], %s791
        %s793 = sand.u32 %s161, 1
        %s794 = smul.addr %s793, 8
        %s795 = scalar_lea.vmem [#allocation8], %s794
        // Predicated region
        $region57: #{tpu_custom_call.1} parent=43 // pred_check
          %p796 = pneg %p171
        $region58: #{tpu_custom_call.1} parent=43 // pred_check_branch
          %798 = sbr.rel (%p796) target = $region60
        $region59: #{tpu_custom_call.1} parent=43 // pred_region
          %s800 = ssub.s32 128, 128
          %801 = vsyncadd %s792, %s800
          %s802 = smul.addr %s22, 128
          %s803 = scalar_lea.hbm %s6, %s802
          %s805 = sshll.u32 %s795, 4
          %s806 = int_to_ptr.vmem [resolvable:$true] %s805
          %808 = dma.vmem_to_hbm [thread:$0]  %s806, 128, %s803, %s792
        $region60: #{tpu_custom_call.1} parent=43 // pred_fallthru
          _
      $region44: #{tpu_custom_call.1} parent=5 // pred_fallthru
        _
      %p809 = scmp.le.s32.totalorder 2, %s17
      // Predicated region
      $region61: #{tpu_custom_call.1} parent=5 // pred_check
        %p810 = pneg %p809
      $region62: #{tpu_custom_call.1} parent=5 // pred_check_branch
        %812 = sbr.rel (%p810) target = $region64
      $region63: #{tpu_custom_call.1} parent=5 // pred_region
        %s813 = ssub.s32 %s17, 2
        // Predicated region
        $region65: #{tpu_custom_call.1} parent=63 // pred_check
          %p814 = pneg %p177
        $region66: #{tpu_custom_call.1} parent=63 // pred_check_branch
          %816 = sbr.rel (%p814) target = $region68
        $region67: #{tpu_custom_call.1} parent=63 // pred_region
          %s817 = sand.u32 %s162, 1
          %s818 = scalar_lea.sflag [#allocation4], %s817
          %s819 = sand.u32 %s162, 1
          %s820 = smul.addr %s819, 8
          %s821 = scalar_lea.vmem [#allocation8], %s820
          %822 = dma.done %s818, 128
        $region68: #{tpu_custom_call.1} parent=63 // pred_fallthru
          _
      $region64: #{tpu_custom_call.1} parent=5 // pred_fallthru
        _
    $region6: #{tpu_custom_call.1} parent=1 // loop_footer
      %s21 = sadd.s32 1, %s17
    $region7: #{tpu_custom_call.1} parent=1 // loop_footer_branch
      %16 = sbr.rel target = $region3
    $region8: #{tpu_custom_call.1} parent=1 // loop_exit
      _
    %823 = vsyncpa [#allocation3], 1
    %s824 = scalar_lea.sflag [#allocation3], 1
    %825 = vsyncpa %s824, 1
    %826 = vsyncpa [#allocation6], 1
    %827 = vsyncpa [#allocation4], 1
    %s828 = scalar_lea.sflag [#allocation4], 1
    %829 = vsyncpa %s828, 1

</llo_original>
